<compile_context>
chip_gen: v5e
topology: v5e:2x2
jax: 0.10.0
libtpu: 0.0.40
codegen_flags: <defaults>
</compile_context>

<pallas_src>
import functools

import jax
import jax.numpy as jnp
from jax import lax
from jax.experimental import pallas as pl
from jax.experimental.pallas import tpu as pltpu


_TOKENS_PER_BLOCK = 256      # tokens gathered per grid step (multiple of 8)
_VOCAB_CHUNK = 2048          # V-chunk width of the in-kernel one-hot matmul
_DMA_INFLIGHT = 32           # concurrent row gathers in the HBM path
_MIN_DMA_ROW_BYTES = 1024    # below this a per-row DMA is pure latency
_TRAFFIC_RATIO = 8           # prefer DMA when table bytes > ratio * gathered bytes


def _round_up(x: int, m: int) -> int:
    return (x + m - 1) // m * m


def _vmem_capacity_bytes() -> int:
    """Per-TensorCore VMEM capacity; conservative fallback if the query fails."""
    try:
        cap = int(pltpu.get_tpu_info().vmem_capacity_bytes)
        if cap > 0:
            return cap
    except Exception:
        pass
    return 64 << 20  # v7x per-core VMEM: the smallest of current generations


# ---------------------------------------------------------------------------
# Path 1: table resident in VMEM, gather via V-chunked one-hot MXU matmul.
# ---------------------------------------------------------------------------
def _mxu_gather_kernel(ids_ref, table_ref, out_ref, *, chunks, precision):
    # ids_ref:   (T, 1) int32 VMEM block
    # table_ref: (V, D) table, resident in VMEM (constant block index)
    # out_ref:   (T, D) lane-dense output block
    ids = ids_ref[...]                                             # (T, 1)
    acc = None
    for v0, vlen in chunks:                                        # static unroll
        # (1, Vc) iota broadcast against (T, 1) ids: never materializes a full
        # (T, V) int32 iota.
        cols = lax.broadcasted_iota(jnp.int32, (1, vlen), 1) + v0
        one_hot = (cols == ids).astype(table_ref.dtype)            # (T, Vc)
        part = jnp.dot(one_hot, table_ref[pl.ds(v0, vlen), :],
                       preferred_element_type=jnp.float32,
                       precision=precision)
        acc = part if acc is None else acc + part
    out_ref[...] = acc.astype(out_ref.dtype)


# ---------------------------------------------------------------------------
# Path 2: table stays in HBM, per-row gather with K DMAs kept in flight.
# ---------------------------------------------------------------------------
def _dma_gather_kernel(ids_ref, table_hbm, out_ref, copy_sems):
    # ids_ref:   (n_blocks, T) int32 in SMEM (scalar prefetch; 2-D to avoid the
    #            next_pow2 padding of 1-D SMEM arrays)
    # table_hbm: (V, D) embedding table in HBM (memory_space=pl.ANY)
    # out_ref:   (T, D) VMEM output block (the DMA destinations)
    # copy_sems: (K,) DMA semaphores -> K row gathers kept in flight
    t = out_ref.shape[0]
    k = copy_sems.shape[0]
    blk = pl.program_id(0)

    def start_row(i):
        tok = ids_ref[blk, i]
        pltpu.make_async_copy(
            table_hbm.at[pl.ds(tok, 1), :],
            out_ref.at[pl.ds(i, 1), :],
            copy_sems.at[i % k],
        ).start()

    def wait_row(i):
        # Dummy source of identical (1, D) shape: wait() only needs the byte
        # count, which must match the copy issued in start_row exactly.
        pltpu.make_async_copy(
            table_hbm.at[pl.ds(0, 1), :],
            out_ref.at[pl.ds(i, 1), :],
            copy_sems.at[i % k],
        ).wait()

    # Prime K gathers (fully unrolled: back-to-back descriptor issue).
    for i in range(k):
        start_row(i)

    # Steady state: retire one row, launch the next (unrolled for LLO overlap).
    if t > k:
        def steady(i, carry):
            wait_row(i - k)
            start_row(i)
            return carry
        lax.fori_loop(k, t, steady, None, unroll=min(8, t - k))

    # Drain the tail (at most K rows, fully unrolled).
    for i in range(t - k, t):
        wait_row(i)


# ---------------------------------------------------------------------------
# Wrapper
# ---------------------------------------------------------------------------
def embedding_lookup(token_ids: jax.Array, embedding_matrix: jax.Array, *,
                     block_tokens: int = _TOKENS_PER_BLOCK,
                     vocab_chunk: int = _VOCAB_CHUNK,
                     path: str | None = None) -> jax.Array:
    """Pallas equivalent of `embedding_matrix[token_ids]` (nn.Embedding forward)."""
    orig_shape = token_ids.shape
    v, d = embedding_matrix.shape
    out_dtype = embedding_matrix.dtype
    itemsize = jnp.dtype(out_dtype).itemsize

    # Flatten and clamp ids (an out-of-range id must never become a wild HBM DMA).
    ids = jnp.clip(token_ids.reshape(-1).astype(jnp.int32), 0, v - 1)
    n = int(ids.shape[0])

    table_bytes = v * d * itemsize
    gather_bytes = n * d * itemsize
    row_bytes = d * itemsize
    vc = max(1, min(v, int(vocab_chunk)))

    capacity = _vmem_capacity_bytes()
    budget = int(capacity * 0.8)

    # Tokens per grid step: start from the request, shrink until the resident
    # working set fits the per-generation VMEM budget (v7x item from review).
    t = _round_up(max(8, min(int(block_tokens), _round_up(n, 8))), 8)

    def mxu_need(tt: int) -> int:
        return (table_bytes                 # table, single-buffered (constant index)
                + 2 * tt * d * itemsize     # output block, double-buffered
                + 2 * tt * 4                # ids block, double-buffered
                + tt * vc * itemsize        # one-hot chunk
                + tt * d * 4                # f32 accumulator
                + (2 << 20))                # slack

    if path is None:
        if mxu_need(8) > budget:
            path = "dma"          # table cannot be made resident at any block size
        elif row_bytes >= _MIN_DMA_ROW_BYTES and _TRAFFIC_RATIO * gather_bytes < table_bytes:
            path = "dma"          # few lookups into a big table: move ~N*D, not V*D
        else:
            path = "mxu"

    if path == "mxu":
        while t > 8 and mxu_need(t) > budget:
            t = _round_up(max(8, t // 2), 8)

    n_pad = _round_up(n, t)
    n_blocks = n_pad // t
    ids_pad = jnp.pad(ids, (0, n_pad - n))   # pad id 0 is a valid row; sliced off below

    if path == "mxu":
        chunks = []
        v0 = 0
        while v0 < v:
            chunks.append((v0, min(vc, v - v0)))
            v0 += vc
        # HIGHEST keeps the f32 one-hot selection (multiply by an exact 1.0)
        # effectively bit-exact on the multi-pass f32 MXU path; bf16 tables are
        # exact with the default precision.
        precision = (lax.Precision.HIGHEST
                     if jnp.dtype(out_dtype) == jnp.dtype(jnp.float32) else None)
        kernel = functools.partial(_mxu_gather_kernel,
                                   chunks=tuple(chunks), precision=precision)
        vmem_limit = int(min(max(mxu_need(t) + table_bytes + (4 << 20), 32 << 20),
                             int(capacity * 0.9)))

        def call_mxu(single_buffer_table: bool):
            if single_buffer_table:
                # Constant block index -> one buffer halves the table's VMEM
                # footprint (largest win on v7x's 64 MiB VMEM).
                table_spec = pl.BlockSpec((v, d), lambda i: (0, 0),
                                          pipeline_mode=pl.Buffered(1))
            else:
                table_spec = pl.BlockSpec((v, d), lambda i: (0, 0))
            return pl.pallas_call(
                kernel,
                grid=(n_blocks,),
                in_specs=[pl.BlockSpec((t, 1), lambda i: (i, 0)),  # ids, VMEM blocks
                          table_spec],                             # resident table
                out_specs=pl.BlockSpec((t, d), lambda i: (i, 0)),
                out_shape=jax.ShapeDtypeStruct((n_pad, d), out_dtype),
                compiler_params=pltpu.CompilerParams(
                    # NOTE: with "parallel" each v7x TensorCore keeps its own
                    # resident table copy; that is fine because the traffic
                    # heuristic already routes table-dominated cases to "dma".
                    dimension_semantics=("parallel",),
                    vmem_limit_bytes=vmem_limit,
                ),
            )(ids_pad.reshape(n_pad, 1), embedding_matrix)

        try:
            out_flat = call_mxu(True)
        except Exception:
            # pl.Buffered(1) unsupported on this build -> default double buffer.
            out_flat = call_mxu(False)

    elif path == "dma":
        k = max(1, min(_DMA_INFLIGHT, t))
        # TODO(synk): the (n_blocks, t) id table is scalar-prefetched into SMEM;
        # for extremely large N, chunk the call to bound SMEM use.
        grid_spec = pltpu.PrefetchScalarGridSpec(
            num_scalar_prefetch=1,
            grid=(n_blocks,),
            in_specs=[pl.BlockSpec(memory_space=pl.ANY)],          # table stays in HBM
            out_specs=pl.BlockSpec((t, d), lambda i, ids: (i, 0)),
            scratch_shapes=[pltpu.SemaphoreType.DMA((k,))],
        )
        out_flat = pl.pallas_call(
            _dma_gather_kernel,
            grid_spec=grid_spec,
            out_shape=jax.ShapeDtypeStruct((n_pad, d), out_dtype),
            compiler_params=pltpu.CompilerParams(
                dimension_semantics=("parallel",),
            ),
        )(ids_pad.reshape(n_blocks, t), embedding_matrix)

    else:
        raise ValueError(f"unknown path {path!r}")

    if n_pad != n:
        out_flat = out_flat[:n]
    return out_flat.reshape(*orig_shape, d)


def init_embedding_matrix(key, num_embeddings: int, embedding_dim: int,
                          dtype=jnp.float32) -> jax.Array:
    # Matches nn.init.trunc_normal_(mean=0, std=1, a=-3, b=3).
    return jax.random.truncated_normal(
        key, -3.0, 3.0, (num_embeddings, embedding_dim), dtype=dtype
    )


if __name__ == "__main__":
    key = jax.random.PRNGKey(0)
    k_emb, k_ids = jax.random.split(key)

    num_embeddings = 64
    embedding_dim = 128
    batch, seq = 2, 8

    embedding_matrix = init_embedding_matrix(k_emb, num_embeddings, embedding_dim)
    token_ids = jax.random.randint(k_ids, (batch, seq), 0, num_embeddings,
                                   dtype=jnp.int32)

    ref = embedding_matrix[token_ids]

    # Default selection (small vocab -> resident-table MXU one-hot gather).
    out = jax.block_until_ready(embedding_lookup(token_ids, embedding_matrix))
    assert out.shape == (batch, seq, embedding_dim)
    assert jnp.allclose(out, ref, atol=1e-5, rtol=1e-5), "mxu path mismatch"

    # Force multi-chunk accumulation over V (exercises the chunked one-hot matmul).
    out_chunked = jax.block_until_ready(
        embedding_lookup(token_ids, embedding_matrix, path="mxu", vocab_chunk=32))
    assert jnp.allclose(out_chunked, ref, atol=1e-5, rtol=1e-5), "chunked mxu mismatch"

    # HBM per-row DMA gather path (used for huge tables / tiny token counts).
    out_dma = jax.block_until_ready(
        embedding_lookup(token_ids, embedding_matrix, path="dma"))
    assert jnp.array_equal(out_dma, ref), "dma path mismatch"

    print("KERNEL_OK")
</pallas_src>

<mosaic_0001>
module attributes {stable_mosaic.version = 11 : i64} {
  func.func @_mxu_gather_kernel(%arg0: i32, %arg1: memref<16x1xi32, #tpu.memory_space<vmem>>, %arg2: memref<64x128xf32, #tpu.memory_space<vmem>>, %arg3: memref<16x128xf32, #tpu.memory_space<vmem>>) attributes {dimension_semantics = [#tpu.dimension_semantics<parallel>], iteration_bounds = array<i64: 1>, scalar_prefetch = 0 : i64, scratch_operands = 0 : i64, tpu.core_type = #tpu.core_type<tc>, window_params = [{transform_indices = @transform_0, window_bounds = array<i64: 16, 1>}, {pipeline_mode = #tpu.pipeline_mode<synchronous>, transform_indices = @transform_1, window_bounds = array<i64: 64, 128>}, {transform_indices = @transform_2, window_bounds = array<i64: 16, 128>}]} {
    %c0 = arith.constant 0 : index
    %c0_0 = arith.constant 0 : index
    %0 = vector.load %arg1[%c0, %c0_0] : memref<16x1xi32, #tpu.memory_space<vmem>>, vector<16x1xi32>
    %1 = tpu.iota {dimensions = array<i32: 1>} : vector<1x64xi32>
    %c0_i32 = arith.constant 0 : i32
    %2 = vector.broadcast %c0_i32 : i32 to vector<1x64xi32>
    %3 = arith.addi %1, %2 : vector<1x64xi32>
    %4 = vector.broadcast %3 : vector<1x64xi32> to vector<16x64xi32>
    %5 = vector.broadcast %0 : vector<16x1xi32> to vector<16x64xi32>
    %6 = arith.cmpi eq, %4, %5 : vector<16x64xi32>
    %7 = arith.extui %6 : vector<16x64xi1> to vector<16x64xi32>
    %8 = arith.sitofp %7 : vector<16x64xi32> to vector<16x64xf32>
    %c0_1 = arith.constant 0 : index
    %c0_2 = arith.constant 0 : index
    %9 = vector.load %arg2[%c0_1, %c0_2] : memref<64x128xf32, #tpu.memory_space<vmem>>, vector<64x128xf32>
    %cst = arith.constant dense<0.000000e+00> : vector<16x128xf32>
    %10 = tpu.matmul %8, %9, %cst {dimension_numbers = #tpu.dot_dimension_numbers<[1], [0], [0], [1], [0, 0, 1, 1], [], []>, precision = #tpu.contract_precision<fp32>} : vector<16x64xf32>, vector<64x128xf32>, vector<16x128xf32> -> vector<16x128xf32>
    %c0_3 = arith.constant 0 : index
    %c0_4 = arith.constant 0 : index
    %11 = vector.load %arg3[%c0_3, %c0_4] : memref<16x128xf32, #tpu.memory_space<vmem>>, vector<16x128xf32>
    tpu.vector_store %arg3[%c0_3, %c0_4], %10 {strides = array<i32>} : memref<16x128xf32, #tpu.memory_space<vmem>>, vector<16x128xf32>,
    return
  }
  func.func @transform_0(%arg0: i32) -> (i32, i32) {
    %c0_i32 = arith.constant 0 : i32
    %c0_i32_0 = arith.constant 0 : i32
    return %arg0, %c0_i32 : i32, i32
  }
  func.func @transform_1(%arg0: i32) -> (i32, i32) {
    %c0_i32 = arith.constant 0 : i32
    %c0_i32_0 = arith.constant 0 : i32
    %c0_i32_1 = arith.constant 0 : i32
    return %c0_i32, %c0_i32_0 : i32, i32
  }
  func.func @transform_2(%arg0: i32) -> (i32, i32) {
    %c0_i32 = arith.constant 0 : i32
    %c0_i32_0 = arith.constant 0 : i32
    return %arg0, %c0_i32 : i32, i32
  }
}

module attributes {stable_mosaic.version = 11 : i64} {
  func.func @_mxu_gather_kernel(%arg0: i32, %arg1: memref<16x1xi32, #tpu.memory_space<vmem>>, %arg2: memref<64x128xf32, #tpu.memory_space<vmem>>, %arg3: memref<16x128xf32, #tpu.memory_space<vmem>>) attributes {dimension_semantics = [#tpu.dimension_semantics<parallel>], iteration_bounds = array<i64: 1>, scalar_prefetch = 0 : i64, scratch_operands = 0 : i64, tpu.core_type = #tpu.core_type<tc>, window_params = [{transform_indices = @transform_0, window_bounds = array<i64: 16, 1>}, {pipeline_mode = #tpu.pipeline_mode<synchronous>, transform_indices = @transform_1, window_bounds = array<i64: 64, 128>}, {transform_indices = @transform_2, window_bounds = array<i64: 16, 128>}]} {
    %c0 = arith.constant 0 : index
    %c0_0 = arith.constant 0 : index
    %0 = vector.load %arg1[%c0, %c0_0] : memref<16x1xi32, #tpu.memory_space<vmem>>, vector<16x1xi32>
    %1 = tpu.iota {dimensions = array<i32: 1>} : vector<1x64xi32>
    %c0_i32 = arith.constant 0 : i32
    %2 = vector.broadcast %c0_i32 : i32 to vector<1x64xi32>
    %3 = arith.addi %1, %2 : vector<1x64xi32>
    %4 = vector.broadcast %3 : vector<1x64xi32> to vector<16x64xi32>
    %5 = vector.broadcast %0 : vector<16x1xi32> to vector<16x64xi32>
    %6 = arith.cmpi eq, %4, %5 : vector<16x64xi32>
    %7 = arith.extui %6 : vector<16x64xi1> to vector<16x64xi32>
    %8 = arith.sitofp %7 : vector<16x64xi32> to vector<16x64xf32>
    %c0_1 = arith.constant 0 : index
    %c0_2 = arith.constant 0 : index
    %9 = vector.load %arg2[%c0_1, %c0_2] : memref<64x128xf32, #tpu.memory_space<vmem>>, vector<64x128xf32>
    %cst = arith.constant dense<0.000000e+00> : vector<16x128xf32>
    %10 = tpu.matmul %8, %9, %cst {dimension_numbers = #tpu.dot_dimension_numbers<[1], [0], [0], [1], [0, 0, 1, 1], [], []>, precision = #tpu.contract_precision<fp32>} : vector<16x64xf32>, vector<64x128xf32>, vector<16x128xf32> -> vector<16x128xf32>
    %c0_3 = arith.constant 0 : index
    %c0_4 = arith.constant 0 : index
    %11 = vector.load %arg3[%c0_3, %c0_4] : memref<16x128xf32, #tpu.memory_space<vmem>>, vector<16x128xf32>
    tpu.vector_store %arg3[%c0_3, %c0_4], %10 {strides = array<i32>} : memref<16x128xf32, #tpu.memory_space<vmem>>, vector<16x128xf32>,
    return
  }
  func.func @transform_0(%arg0: i32) -> (i32, i32) {
    %c0_i32 = arith.constant 0 : i32
    %c0_i32_0 = arith.constant 0 : i32
    return %arg0, %c0_i32 : i32, i32
  }
  func.func @transform_1(%arg0: i32) -> (i32, i32) {
    %c0_i32 = arith.constant 0 : i32
    %c0_i32_0 = arith.constant 0 : i32
    %c0_i32_1 = arith.constant 0 : i32
    return %c0_i32, %c0_i32_0 : i32, i32
  }
  func.func @transform_2(%arg0: i32) -> (i32, i32) {
    %c0_i32 = arith.constant 0 : i32
    %c0_i32_0 = arith.constant 0 : i32
    return %arg0, %c0_i32 : i32, i32
  }
}

</mosaic_0001>

<llo_original>
// kernel: tpu_custom_call.1
$region0: #{tpu_custom_call.1}
  #allocation0 [shape = 'u32[]', space=smem, size = 0x4, offset = 0x4, fixed_abs, tag = 'smem constant byte address 0x4 - core index']
  #allocation1 [shape = 'u32[72,128]{1,0:T(1,128)}', space=vmem, size = 0x9000, scoped, tag = 'internal scratch']
  %s0 = inlined_call_operand.vmem [shape: s32[16,1], index: 0, kind: input, shape index: {}]
  %s1 = inlined_call_operand.hbm [shape: f32[64,128], index: 1, kind: input, shape index: {}]
  %s2 = inlined_call_operand.hbm [shape: f32[16,128], index: 2, kind: output, shape index: {}]
  %s3 = sld [smem:[#allocation0]]
  $region22: #{tpu_custom_call.1} parent=0
    _
  %s5 = ssub.s32 1, %s3
  %s6 = scalar_select 0, %s5, %s3
  $region1: #{tpu_custom_call.1} parent=0
    #allocation2 [shape = 'u8[32768]{0}', space=vmem, size = 0x8000, scoped, tag = 'input window, operand 1, single buffered']
    #allocation3 [shape = 's32[1]{0}', space=sflag, size = 0x4, scoped, tag = 'scoped memory for tpu_custom_call.1']
    #allocation4 [shape = 's32[1]{0}', space=sflag, size = 0x4, scoped, tag = 'scoped memory for tpu_custom_call.1']
    #allocation5 [shape = 'u8[8192]{0}', space=vmem, size = 0x2000, scoped, tag = 'output window, operand 0, single buffered']
    %7 = vsyncpa [#allocation3], 0
    %8 = vsyncpa [#allocation4], 0
    // Predicated region
    $region2: #{tpu_custom_call.1} parent=1 // pred_check
      _
    $region3: #{tpu_custom_call.1} parent=1 // pred_check_branch
      %10 = sbr.rel (0) target = $region5
    $region4: #{tpu_custom_call.1} parent=1 // pred_region
      _
    $region5: #{tpu_custom_call.1} parent=1 // pred_fallthru
      _
    // Predicated region
    $region6: #{tpu_custom_call.1} parent=1 // pred_check
      _
    $region7: #{tpu_custom_call.1} parent=1 // pred_check_branch
      %12 = sbr.rel (0) target = $region9
    $region8: #{tpu_custom_call.1} parent=1 // pred_region
      %14 = vsyncadd [#allocation3], 0
      %s15 = sshll.u32 %s1, 4
      %s16 = int_to_ptr.hbm [resolvable:$true] %s15
      %s17 = sshll.u32 [#allocation2], 4
      %s18 = int_to_ptr.vmem [resolvable:$true] %s17
      %23 = dma.hbm_to_vmem [thread:$0]  %s16, 1024, %s18, [#allocation3], 128, 128, 8
    $region9: #{tpu_custom_call.1} parent=1 // pred_fallthru
      _
    // Predicated region
    $region10: #{tpu_custom_call.1} parent=1 // pred_check
      _
    $region11: #{tpu_custom_call.1} parent=1 // pred_check_branch
      %25 = sbr.rel (0) target = $region13
    $region12: #{tpu_custom_call.1} parent=1 // pred_region
      %27 = dma.done [#allocation3], 1024
    $region13: #{tpu_custom_call.1} parent=1 // pred_fallthru
      _
    %v28 = vld [vmem:[%s0] sm:$0xff]
    %v29 = vld [vmem:[%s0 + $0x8] sm:$0xff]
    %v30 = vlaneseq
    %v31 = vand.u32 %v30, 127
    %32 = vset.pattern.permute.xlu0 0
    %33 = vperm.xlu0 %32, %v28
    %v34 = vpop.permute.xlu0 %33
    %35 = vset.pattern.permute.xlu0 0
    %36 = vperm.xlu0 %35, %v29
    %v37 = vpop.permute.xlu0 %36
    %vm38 = vcmp.eq.s32.totalorder %v31, %v34
    %vm39 = vcmp.eq.s32.totalorder %v31, %v37
    %v40 = vsel %vm38, 1, 0
    %v41 = vsel %vm39, 1, 0
    %v42 = vcvt.s32.f32 %v40
    %v43 = vcvt.s32.f32 %v41
    %v44 = vld [vmem:[#allocation2] sm:$0xff]
    %v45 = vld [vmem:[#allocation2 + $0x8] sm:$0xff]
    %v46 = vld [vmem:[#allocation2 + $0x10] sm:$0xff]
    %v47 = vld [vmem:[#allocation2 + $0x18] sm:$0xff]
    %v48 = vld [vmem:[#allocation2 + $0x20] sm:$0xff]
    %v49 = vld [vmem:[#allocation2 + $0x28] sm:$0xff]
    %v50 = vld [vmem:[#allocation2 + $0x30] sm:$0xff]
    %v51 = vld [vmem:[#allocation2 + $0x38] sm:$0xff]
    %vm52 = vcmask 523264
    %v54 = vsel %vm52, %v42, 0
    %v57 = vsel %vm52, %v43, 0
    %59 = vmatpush.msra.mxu0 0.0
    %60 = vmatpush.msra.mxu0 0.0
    %61 = vmatpush.msra.mxu0 0.0
    %62 = vmatpush.msra.mxu0 0.0
    %63 = vmatpush.msra.mxu0 0.0
    %64 = vmatpush.msra.mxu0 0.0
    %65 = vmatpush.msra.mxu0 0.0
    %66 = vmatpush.msra.mxu0 0.0
    %v67 = vand.u32 %v51, 4294901760
    %68 = vmatpush.msra.mxu0 %v67
    %v69 = vand.u32 %v50, 4294901760
    %70 = vmatpush.msra.mxu0 %v69
    %v71 = vand.u32 %v49, 4294901760
    %72 = vmatpush.msra.mxu0 %v71
    %v73 = vand.u32 %v48, 4294901760
    %74 = vmatpush.msra.mxu0 %v73
    %v75 = vand.u32 %v47, 4294901760
    %76 = vmatpush.msra.mxu0 %v75
    %v77 = vand.u32 %v46, 4294901760
    %78 = vmatpush.msra.mxu0 %v77
    %v79 = vand.u32 %v45, 4294901760
    %80 = vmatpush.msra.mxu0 %v79
    %v81 = vand.u32 %v44, 4294901760
    %82 = vmatpush.msra.mxu0 %v81
    %v83 = vand.u32 %v54, 4294901760
    %v84 = vsub.f32 %v54, %v83
    %v85 = vand.u32 %v84, 4294901760
    %v86 = vsub.f32 %v84, %v85
    %v87 = vand.u32 %v86, 4294901760
    %88 = vmatmul.f32.gmra.mxu0 %v87
    %v89 = vpop.f32.mrf.mxu0
    %v90 = vadd.f32 0.0, %v89
    %v91 = vand.u32 %v57, 4294901760
    %v92 = vsub.f32 %v57, %v91
    %v93 = vand.u32 %v92, 4294901760
    %v94 = vsub.f32 %v92, %v93
    %v95 = vand.u32 %v94, 4294901760
    %96 = vmatmul.f32.gmra.mxu0 %v95
    %v97 = vpop.f32.mrf.mxu0
    %v98 = vadd.f32 0.0, %v97
    %99 = vdwg.mxu0
    %100 = vmatpush.msra.mxu0 0.0
    %101 = vmatpush.msra.mxu0 0.0
    %102 = vmatpush.msra.mxu0 0.0
    %103 = vmatpush.msra.mxu0 0.0
    %104 = vmatpush.msra.mxu0 0.0
    %105 = vmatpush.msra.mxu0 0.0
    %106 = vmatpush.msra.mxu0 0.0
    %107 = vmatpush.msra.mxu0 0.0
    %v108 = vand.u32 %v51, 4294901760
    %v109 = vsub.f32 %v51, %v108
    %v110 = vand.u32 %v109, 4294901760
    %v111 = vsub.f32 %v109, %v110
    %v112 = vand.u32 %v111, 4294901760
    %113 = vmatpush.msra.mxu0 %v112
    %v114 = vand.u32 %v50, 4294901760
    %v115 = vsub.f32 %v50, %v114
    %v116 = vand.u32 %v115, 4294901760
    %v117 = vsub.f32 %v115, %v116
    %v118 = vand.u32 %v117, 4294901760
    %119 = vmatpush.msra.mxu0 %v118
    %v120 = vand.u32 %v49, 4294901760
    %v121 = vsub.f32 %v49, %v120
    %v122 = vand.u32 %v121, 4294901760
    %v123 = vsub.f32 %v121, %v122
    %v124 = vand.u32 %v123, 4294901760
    %125 = vmatpush.msra.mxu0 %v124
    %v126 = vand.u32 %v48, 4294901760
    %v127 = vsub.f32 %v48, %v126
    %v128 = vand.u32 %v127, 4294901760
    %v129 = vsub.f32 %v127, %v128
    %v130 = vand.u32 %v129, 4294901760
    %131 = vmatpush.msra.mxu0 %v130
    %v132 = vand.u32 %v47, 4294901760
    %v133 = vsub.f32 %v47, %v132
    %v134 = vand.u32 %v133, 4294901760
    %v135 = vsub.f32 %v133, %v134
    %v136 = vand.u32 %v135, 4294901760
    %137 = vmatpush.msra.mxu0 %v136
    %v138 = vand.u32 %v46, 4294901760
    %v139 = vsub.f32 %v46, %v138
    %v140 = vand.u32 %v139, 4294901760
    %v141 = vsub.f32 %v139, %v140
    %v142 = vand.u32 %v141, 4294901760
    %143 = vmatpush.msra.mxu0 %v142
    %v144 = vand.u32 %v45, 4294901760
    %v145 = vsub.f32 %v45, %v144
    %v146 = vand.u32 %v145, 4294901760
    %v147 = vsub.f32 %v145, %v146
    %v148 = vand.u32 %v147, 4294901760
    %149 = vmatpush.msra.mxu0 %v148
    %v150 = vand.u32 %v44, 4294901760
    %v151 = vsub.f32 %v44, %v150
    %v152 = vand.u32 %v151, 4294901760
    %v153 = vsub.f32 %v151, %v152
    %v154 = vand.u32 %v153, 4294901760
    %155 = vmatpush.msra.mxu0 %v154
    %v156 = vand.u32 %v54, 4294901760
    %157 = vmatmul.f32.gmra.mxu0 %v156
    %v158 = vpop.f32.mrf.mxu0
    %v159 = vadd.f32 %v90, %v158
    %v160 = vand.u32 %v57, 4294901760
    %161 = vmatmul.f32.gmra.mxu0 %v160
    %v162 = vpop.f32.mrf.mxu0
    %v163 = vadd.f32 %v98, %v162
    %164 = vdwg.mxu0
    %165 = vmatpush.msra.mxu0 0.0
    %166 = vmatpush.msra.mxu0 0.0
    %167 = vmatpush.msra.mxu0 0.0
    %168 = vmatpush.msra.mxu0 0.0
    %169 = vmatpush.msra.mxu0 0.0
    %170 = vmatpush.msra.mxu0 0.0
    %171 = vmatpush.msra.mxu0 0.0
    %172 = vmatpush.msra.mxu0 0.0
    %v173 = vand.u32 %v51, 4294901760
    %v174 = vsub.f32 %v51, %v173
    %175 = vmatpush.msra.mxu0 %v174
    %v176 = vand.u32 %v50, 4294901760
    %v177 = vsub.f32 %v50, %v176
    %178 = vmatpush.msra.mxu0 %v177
    %v179 = vand.u32 %v49, 4294901760
    %v180 = vsub.f32 %v49, %v179
    %181 = vmatpush.msra.mxu0 %v180
    %v182 = vand.u32 %v48, 4294901760
    %v183 = vsub.f32 %v48, %v182
    %184 = vmatpush.msra.mxu0 %v183
    %v185 = vand.u32 %v47, 4294901760
    %v186 = vsub.f32 %v47, %v185
    %187 = vmatpush.msra.mxu0 %v186
    %v188 = vand.u32 %v46, 4294901760
    %v189 = vsub.f32 %v46, %v188
    %190 = vmatpush.msra.mxu0 %v189
    %v191 = vand.u32 %v45, 4294901760
    %v192 = vsub.f32 %v45, %v191
    %193 = vmatpush.msra.mxu0 %v192
    %v194 = vand.u32 %v44, 4294901760
    %v195 = vsub.f32 %v44, %v194
    %196 = vmatpush.msra.mxu0 %v195
    %v197 = vand.u32 %v54, 4294901760
    %v198 = vsub.f32 %v54, %v197
    %199 = vmatmul.f32.gmra.mxu0 %v198
    %v200 = vpop.f32.mrf.mxu0
    %v201 = vadd.f32 %v159, %v200
    %v202 = vand.u32 %v57, 4294901760
    %v203 = vsub.f32 %v57, %v202
    %204 = vmatmul.f32.gmra.mxu0 %v203
    %v205 = vpop.f32.mrf.mxu0
    %v206 = vadd.f32 %v163, %v205
    %207 = vdwg.mxu0
    %208 = vmatpush.msra.mxu0 0.0
    %209 = vmatpush.msra.mxu0 0.0
    %210 = vmatpush.msra.mxu0 0.0
    %211 = vmatpush.msra.mxu0 0.0
    %212 = vmatpush.msra.mxu0 0.0
    %213 = vmatpush.msra.mxu0 0.0
    %214 = vmatpush.msra.mxu0 0.0
    %215 = vmatpush.msra.mxu0 0.0
    %v216 = vand.u32 %v51, 4294901760
    %217 = vmatpush.msra.mxu0 %v216
    %v218 = vand.u32 %v50, 4294901760
    %219 = vmatpush.msra.mxu0 %v218
    %v220 = vand.u32 %v49, 4294901760
    %221 = vmatpush.msra.mxu0 %v220
    %v222 = vand.u32 %v48, 4294901760
    %223 = vmatpush.msra.mxu0 %v222
    %v224 = vand.u32 %v47, 4294901760
    %225 = vmatpush.msra.mxu0 %v224
    %v226 = vand.u32 %v46, 4294901760
    %227 = vmatpush.msra.mxu0 %v226
    %v228 = vand.u32 %v45, 4294901760
    %229 = vmatpush.msra.mxu0 %v228
    %v230 = vand.u32 %v44, 4294901760
    %231 = vmatpush.msra.mxu0 %v230
    %v232 = vand.u32 %v54, 4294901760
    %v233 = vsub.f32 %v54, %v232
    %v234 = vand.u32 %v233, 4294901760
    %235 = vmatmul.f32.gmra.mxu0 %v234
    %v236 = vpop.f32.mrf.mxu0
    %v237 = vadd.f32 %v201, %v236
    %v238 = vand.u32 %v57, 4294901760
    %v239 = vsub.f32 %v57, %v238
    %v240 = vand.u32 %v239, 4294901760
    %241 = vmatmul.f32.gmra.mxu0 %v240
    %v242 = vpop.f32.mrf.mxu0
    %v243 = vadd.f32 %v206, %v242
    %244 = vdwg.mxu0
    %245 = vmatpush.msra.mxu0 0.0
    %246 = vmatpush.msra.mxu0 0.0
    %247 = vmatpush.msra.mxu0 0.0
    %248 = vmatpush.msra.mxu0 0.0
    %249 = vmatpush.msra.mxu0 0.0
    %250 = vmatpush.msra.mxu0 0.0
    %251 = vmatpush.msra.mxu0 0.0
    %252 = vmatpush.msra.mxu0 0.0
    %v253 = vand.u32 %v51, 4294901760
    %v254 = vsub.f32 %v51, %v253
    %v255 = vand.u32 %v254, 4294901760
    %256 = vmatpush.msra.mxu0 %v255
    %v257 = vand.u32 %v50, 4294901760
    %v258 = vsub.f32 %v50, %v257
    %v259 = vand.u32 %v258, 4294901760
    %260 = vmatpush.msra.mxu0 %v259
    %v261 = vand.u32 %v49, 4294901760
    %v262 = vsub.f32 %v49, %v261
    %v263 = vand.u32 %v262, 4294901760
    %264 = vmatpush.msra.mxu0 %v263
    %v265 = vand.u32 %v48, 4294901760
    %v266 = vsub.f32 %v48, %v265
    %v267 = vand.u32 %v266, 4294901760
    %268 = vmatpush.msra.mxu0 %v267
    %v269 = vand.u32 %v47, 4294901760
    %v270 = vsub.f32 %v47, %v269
    %v271 = vand.u32 %v270, 4294901760
    %272 = vmatpush.msra.mxu0 %v271
    %v273 = vand.u32 %v46, 4294901760
    %v274 = vsub.f32 %v46, %v273
    %v275 = vand.u32 %v274, 4294901760
    %276 = vmatpush.msra.mxu0 %v275
    %v277 = vand.u32 %v45, 4294901760
    %v278 = vsub.f32 %v45, %v277
    %v279 = vand.u32 %v278, 4294901760
    %280 = vmatpush.msra.mxu0 %v279
    %v281 = vand.u32 %v44, 4294901760
    %v282 = vsub.f32 %v44, %v281
    %v283 = vand.u32 %v282, 4294901760
    %284 = vmatpush.msra.mxu0 %v283
    %v285 = vand.u32 %v54, 4294901760
    %286 = vmatmul.f32.gmra.mxu0 %v285
    %v287 = vpop.f32.mrf.mxu0
    %v288 = vadd.f32 %v237, %v287
    %v289 = vand.u32 %v57, 4294901760
    %290 = vmatmul.f32.gmra.mxu0 %v289
    %v291 = vpop.f32.mrf.mxu0
    %v292 = vadd.f32 %v243, %v291
    %293 = vdwg.mxu0
    %294 = vmatpush.msra.mxu0 0.0
    %295 = vmatpush.msra.mxu0 0.0
    %296 = vmatpush.msra.mxu0 0.0
    %297 = vmatpush.msra.mxu0 0.0
    %298 = vmatpush.msra.mxu0 0.0
    %299 = vmatpush.msra.mxu0 0.0
    %300 = vmatpush.msra.mxu0 0.0
    %301 = vmatpush.msra.mxu0 0.0
    %v302 = vand.u32 %v51, 4294901760
    %303 = vmatpush.msra.mxu0 %v302
    %v304 = vand.u32 %v50, 4294901760
    %305 = vmatpush.msra.mxu0 %v304
    %v306 = vand.u32 %v49, 4294901760
    %307 = vmatpush.msra.mxu0 %v306
    %v308 = vand.u32 %v48, 4294901760
    %309 = vmatpush.msra.mxu0 %v308
    %v310 = vand.u32 %v47, 4294901760
    %311 = vmatpush.msra.mxu0 %v310
    %v312 = vand.u32 %v46, 4294901760
    %313 = vmatpush.msra.mxu0 %v312
    %v314 = vand.u32 %v45, 4294901760
    %315 = vmatpush.msra.mxu0 %v314
    %v316 = vand.u32 %v44, 4294901760
    %317 = vmatpush.msra.mxu0 %v316
    %v318 = vand.u32 %v54, 4294901760
    %319 = vmatmul.f32.gmra.mxu0 %v318
    %v320 = vpop.f32.mrf.mxu0
    %v321 = vadd.f32 %v288, %v320
    %v322 = vand.u32 %v57, 4294901760
    %323 = vmatmul.f32.gmra.mxu0 %v322
    %v324 = vpop.f32.mrf.mxu0
    %v325 = vadd.f32 %v292, %v324
    %326 = vdwg.mxu0
    %327 = vst [vmem:[#allocation5] sm:$0xff] %v321
    %328 = vst [vmem:[#allocation5 + $0x8] sm:$0xff] %v325
    // Predicated region
    $region14: #{tpu_custom_call.1} parent=1 // pred_check
      _
    $region15: #{tpu_custom_call.1} parent=1 // pred_check_branch
      %330 = sbr.rel (0) target = $region17
    $region16: #{tpu_custom_call.1} parent=1 // pred_region
      %332 = vsyncadd [#allocation4], 0
      %s333 = sshll.u32 [#allocation5], 4
      %s334 = int_to_ptr.vmem [resolvable:$true] %s333
      %s335 = sshll.u32 %s2, 4
      %s336 = int_to_ptr.hbm [resolvable:$true] %s335
      %341 = dma.vmem_to_hbm [thread:$0]  %s334, 256, %s336, [#allocation4], 128, 128, 8
    $region17: #{tpu_custom_call.1} parent=1 // pred_fallthru
      _
    // Predicated region
    $region18: #{tpu_custom_call.1} parent=1 // pred_check
      _
    $region19: #{tpu_custom_call.1} parent=1 // pred_check_branch
      %343 = sbr.rel (0) target = $region21
    $region20: #{tpu_custom_call.1} parent=1 // pred_region
      %345 = dma.done [#allocation4], 256
    $region21: #{tpu_custom_call.1} parent=1 // pred_fallthru
      _
    %346 = vsyncpa [#allocation3], 1
    %347 = vsyncpa [#allocation4], 1

// kernel: tpu_custom_call.1
$region0: #{tpu_custom_call.1}
  #allocation0 [shape = 'u32[]', space=smem, size = 0x4, offset = 0x4, fixed_abs, tag = 'smem constant byte address 0x4 - core index']
  #allocation1 [shape = 'u32[72,128]{1,0:T(1,128)}', space=vmem, size = 0x9000, scoped, tag = 'internal scratch']
  %s0 = inlined_call_operand.vmem [shape: s32[16,1], index: 0, kind: input, shape index: {}]
  %s1 = inlined_call_operand.hbm [shape: f32[64,128], index: 1, kind: input, shape index: {}]
  %s2 = inlined_call_operand.hbm [shape: f32[16,128], index: 2, kind: output, shape index: {}]
  %s3 = sld [smem:[#allocation0]]
  $region22: #{tpu_custom_call.1} parent=0
    _
  %s5 = ssub.s32 1, %s3
  %s6 = scalar_select 0, %s5, %s3
  $region1: #{tpu_custom_call.1} parent=0
    #allocation2 [shape = 'u8[32768]{0}', space=vmem, size = 0x8000, scoped, tag = 'input window, operand 1, single buffered']
    #allocation3 [shape = 's32[1]{0}', space=sflag, size = 0x4, scoped, tag = 'scoped memory for tpu_custom_call.1']
    #allocation4 [shape = 's32[1]{0}', space=sflag, size = 0x4, scoped, tag = 'scoped memory for tpu_custom_call.1']
    #allocation5 [shape = 'u8[8192]{0}', space=vmem, size = 0x2000, scoped, tag = 'output window, operand 0, single buffered']
    %7 = vsyncpa [#allocation3], 0
    %8 = vsyncpa [#allocation4], 0
    // Predicated region
    $region2: #{tpu_custom_call.1} parent=1 // pred_check
      _
    $region3: #{tpu_custom_call.1} parent=1 // pred_check_branch
      %10 = sbr.rel (0) target = $region5
    $region4: #{tpu_custom_call.1} parent=1 // pred_region
      _
    $region5: #{tpu_custom_call.1} parent=1 // pred_fallthru
      _
    // Predicated region
    $region6: #{tpu_custom_call.1} parent=1 // pred_check
      _
    $region7: #{tpu_custom_call.1} parent=1 // pred_check_branch
      %12 = sbr.rel (0) target = $region9
    $region8: #{tpu_custom_call.1} parent=1 // pred_region
      %14 = vsyncadd [#allocation3], 0
      %s15 = sshll.u32 %s1, 4
      %s16 = int_to_ptr.hbm [resolvable:$true] %s15
      %s17 = sshll.u32 [#allocation2], 4
      %s18 = int_to_ptr.vmem [resolvable:$true] %s17
      %23 = dma.hbm_to_vmem [thread:$0]  %s16, 1024, %s18, [#allocation3], 128, 128, 8
    $region9: #{tpu_custom_call.1} parent=1 // pred_fallthru
      _
    // Predicated region
    $region10: #{tpu_custom_call.1} parent=1 // pred_check
      _
    $region11: #{tpu_custom_call.1} parent=1 // pred_check_branch
      %25 = sbr.rel (0) target = $region13
    $region12: #{tpu_custom_call.1} parent=1 // pred_region
      %27 = dma.done [#allocation3], 1024
    $region13: #{tpu_custom_call.1} parent=1 // pred_fallthru
      _
    %v28 = vld [vmem:[%s0] sm:$0xff]
    %v29 = vld [vmem:[%s0 + $0x8] sm:$0xff]
    %v30 = vlaneseq
    %v31 = vand.u32 %v30, 127
    %32 = vset.pattern.permute.xlu0 0
    %33 = vperm.xlu0 %32, %v28
    %v34 = vpop.permute.xlu0 %33
    %35 = vset.pattern.permute.xlu0 0
    %36 = vperm.xlu0 %35, %v29
    %v37 = vpop.permute.xlu0 %36
    %vm38 = vcmp.eq.s32.totalorder %v31, %v34
    %vm39 = vcmp.eq.s32.totalorder %v31, %v37
    %v40 = vsel %vm38, 1, 0
    %v41 = vsel %vm39, 1, 0
    %v42 = vcvt.s32.f32 %v40
    %v43 = vcvt.s32.f32 %v41
    %v44 = vld [vmem:[#allocation2] sm:$0xff]
    %v45 = vld [vmem:[#allocation2 + $0x8] sm:$0xff]
    %v46 = vld [vmem:[#allocation2 + $0x10] sm:$0xff]
    %v47 = vld [vmem:[#allocation2 + $0x18] sm:$0xff]
    %v48 = vld [vmem:[#allocation2 + $0x20] sm:$0xff]
    %v49 = vld [vmem:[#allocation2 + $0x28] sm:$0xff]
    %v50 = vld [vmem:[#allocation2 + $0x30] sm:$0xff]
    %v51 = vld [vmem:[#allocation2 + $0x38] sm:$0xff]
    %vm52 = vcmask 523264
    %v54 = vsel %vm52, %v42, 0
    %v57 = vsel %vm52, %v43, 0
    %59 = vmatpush.msra.mxu0 0.0
    %60 = vmatpush.msra.mxu0 0.0
    %61 = vmatpush.msra.mxu0 0.0
    %62 = vmatpush.msra.mxu0 0.0
    %63 = vmatpush.msra.mxu0 0.0
    %64 = vmatpush.msra.mxu0 0.0
    %65 = vmatpush.msra.mxu0 0.0
    %66 = vmatpush.msra.mxu0 0.0
    %v67 = vand.u32 %v51, 4294901760
    %68 = vmatpush.msra.mxu0 %v67
    %v69 = vand.u32 %v50, 4294901760
    %70 = vmatpush.msra.mxu0 %v69
    %v71 = vand.u32 %v49, 4294901760
    %72 = vmatpush.msra.mxu0 %v71
    %v73 = vand.u32 %v48, 4294901760
    %74 = vmatpush.msra.mxu0 %v73
    %v75 = vand.u32 %v47, 4294901760
    %76 = vmatpush.msra.mxu0 %v75
    %v77 = vand.u32 %v46, 4294901760
    %78 = vmatpush.msra.mxu0 %v77
    %v79 = vand.u32 %v45, 4294901760
    %80 = vmatpush.msra.mxu0 %v79
    %v81 = vand.u32 %v44, 4294901760
    %82 = vmatpush.msra.mxu0 %v81
    %v83 = vand.u32 %v54, 4294901760
    %v84 = vsub.f32 %v54, %v83
    %v85 = vand.u32 %v84, 4294901760
    %v86 = vsub.f32 %v84, %v85
    %v87 = vand.u32 %v86, 4294901760
    %88 = vmatmul.f32.gmra.mxu0 %v87
    %v89 = vpop.f32.mrf.mxu0
    %v90 = vadd.f32 0.0, %v89
    %v91 = vand.u32 %v57, 4294901760
    %v92 = vsub.f32 %v57, %v91
    %v93 = vand.u32 %v92, 4294901760
    %v94 = vsub.f32 %v92, %v93
    %v95 = vand.u32 %v94, 4294901760
    %96 = vmatmul.f32.gmra.mxu0 %v95
    %v97 = vpop.f32.mrf.mxu0
    %v98 = vadd.f32 0.0, %v97
    %99 = vdwg.mxu0
    %100 = vmatpush.msra.mxu0 0.0
    %101 = vmatpush.msra.mxu0 0.0
    %102 = vmatpush.msra.mxu0 0.0
    %103 = vmatpush.msra.mxu0 0.0
    %104 = vmatpush.msra.mxu0 0.0
    %105 = vmatpush.msra.mxu0 0.0
    %106 = vmatpush.msra.mxu0 0.0
    %107 = vmatpush.msra.mxu0 0.0
    %v108 = vand.u32 %v51, 4294901760
    %v109 = vsub.f32 %v51, %v108
    %v110 = vand.u32 %v109, 4294901760
    %v111 = vsub.f32 %v109, %v110
    %v112 = vand.u32 %v111, 4294901760
    %113 = vmatpush.msra.mxu0 %v112
    %v114 = vand.u32 %v50, 4294901760
    %v115 = vsub.f32 %v50, %v114
    %v116 = vand.u32 %v115, 4294901760
    %v117 = vsub.f32 %v115, %v116
    %v118 = vand.u32 %v117, 4294901760
    %119 = vmatpush.msra.mxu0 %v118
    %v120 = vand.u32 %v49, 4294901760
    %v121 = vsub.f32 %v49, %v120
    %v122 = vand.u32 %v121, 4294901760
    %v123 = vsub.f32 %v121, %v122
    %v124 = vand.u32 %v123, 4294901760
    %125 = vmatpush.msra.mxu0 %v124
    %v126 = vand.u32 %v48, 4294901760
    %v127 = vsub.f32 %v48, %v126
    %v128 = vand.u32 %v127, 4294901760
    %v129 = vsub.f32 %v127, %v128
    %v130 = vand.u32 %v129, 4294901760
    %131 = vmatpush.msra.mxu0 %v130
    %v132 = vand.u32 %v47, 4294901760
    %v133 = vsub.f32 %v47, %v132
    %v134 = vand.u32 %v133, 4294901760
    %v135 = vsub.f32 %v133, %v134
    %v136 = vand.u32 %v135, 4294901760
    %137 = vmatpush.msra.mxu0 %v136
    %v138 = vand.u32 %v46, 4294901760
    %v139 = vsub.f32 %v46, %v138
    %v140 = vand.u32 %v139, 4294901760
    %v141 = vsub.f32 %v139, %v140
    %v142 = vand.u32 %v141, 4294901760
    %143 = vmatpush.msra.mxu0 %v142
    %v144 = vand.u32 %v45, 4294901760
    %v145 = vsub.f32 %v45, %v144
    %v146 = vand.u32 %v145, 4294901760
    %v147 = vsub.f32 %v145, %v146
    %v148 = vand.u32 %v147, 4294901760
    %149 = vmatpush.msra.mxu0 %v148
    %v150 = vand.u32 %v44, 4294901760
    %v151 = vsub.f32 %v44, %v150
    %v152 = vand.u32 %v151, 4294901760
    %v153 = vsub.f32 %v151, %v152
    %v154 = vand.u32 %v153, 4294901760
    %155 = vmatpush.msra.mxu0 %v154
    %v156 = vand.u32 %v54, 4294901760
    %157 = vmatmul.f32.gmra.mxu0 %v156
    %v158 = vpop.f32.mrf.mxu0
    %v159 = vadd.f32 %v90, %v158
    %v160 = vand.u32 %v57, 4294901760
    %161 = vmatmul.f32.gmra.mxu0 %v160
    %v162 = vpop.f32.mrf.mxu0
    %v163 = vadd.f32 %v98, %v162
    %164 = vdwg.mxu0
    %165 = vmatpush.msra.mxu0 0.0
    %166 = vmatpush.msra.mxu0 0.0
    %167 = vmatpush.msra.mxu0 0.0
    %168 = vmatpush.msra.mxu0 0.0
    %169 = vmatpush.msra.mxu0 0.0
    %170 = vmatpush.msra.mxu0 0.0
    %171 = vmatpush.msra.mxu0 0.0
    %172 = vmatpush.msra.mxu0 0.0
    %v173 = vand.u32 %v51, 4294901760
    %v174 = vsub.f32 %v51, %v173
    %175 = vmatpush.msra.mxu0 %v174
    %v176 = vand.u32 %v50, 4294901760
    %v177 = vsub.f32 %v50, %v176
    %178 = vmatpush.msra.mxu0 %v177
    %v179 = vand.u32 %v49, 4294901760
    %v180 = vsub.f32 %v49, %v179
    %181 = vmatpush.msra.mxu0 %v180
    %v182 = vand.u32 %v48, 4294901760
    %v183 = vsub.f32 %v48, %v182
    %184 = vmatpush.msra.mxu0 %v183
    %v185 = vand.u32 %v47, 4294901760
    %v186 = vsub.f32 %v47, %v185
    %187 = vmatpush.msra.mxu0 %v186
    %v188 = vand.u32 %v46, 4294901760
    %v189 = vsub.f32 %v46, %v188
    %190 = vmatpush.msra.mxu0 %v189
    %v191 = vand.u32 %v45, 4294901760
    %v192 = vsub.f32 %v45, %v191
    %193 = vmatpush.msra.mxu0 %v192
    %v194 = vand.u32 %v44, 4294901760
    %v195 = vsub.f32 %v44, %v194
    %196 = vmatpush.msra.mxu0 %v195
    %v197 = vand.u32 %v54, 4294901760
    %v198 = vsub.f32 %v54, %v197
    %199 = vmatmul.f32.gmra.mxu0 %v198
    %v200 = vpop.f32.mrf.mxu0
    %v201 = vadd.f32 %v159, %v200
    %v202 = vand.u32 %v57, 4294901760
    %v203 = vsub.f32 %v57, %v202
    %204 = vmatmul.f32.gmra.mxu0 %v203
    %v205 = vpop.f32.mrf.mxu0
    %v206 = vadd.f32 %v163, %v205
    %207 = vdwg.mxu0
    %208 = vmatpush.msra.mxu0 0.0
    %209 = vmatpush.msra.mxu0 0.0
    %210 = vmatpush.msra.mxu0 0.0
    %211 = vmatpush.msra.mxu0 0.0
    %212 = vmatpush.msra.mxu0 0.0
    %213 = vmatpush.msra.mxu0 0.0
    %214 = vmatpush.msra.mxu0 0.0
    %215 = vmatpush.msra.mxu0 0.0
    %v216 = vand.u32 %v51, 4294901760
    %217 = vmatpush.msra.mxu0 %v216
    %v218 = vand.u32 %v50, 4294901760
    %219 = vmatpush.msra.mxu0 %v218
    %v220 = vand.u32 %v49, 4294901760
    %221 = vmatpush.msra.mxu0 %v220
    %v222 = vand.u32 %v48, 4294901760
    %223 = vmatpush.msra.mxu0 %v222
    %v224 = vand.u32 %v47, 4294901760
    %225 = vmatpush.msra.mxu0 %v224
    %v226 = vand.u32 %v46, 4294901760
    %227 = vmatpush.msra.mxu0 %v226
    %v228 = vand.u32 %v45, 4294901760
    %229 = vmatpush.msra.mxu0 %v228
    %v230 = vand.u32 %v44, 4294901760
    %231 = vmatpush.msra.mxu0 %v230
    %v232 = vand.u32 %v54, 4294901760
    %v233 = vsub.f32 %v54, %v232
    %v234 = vand.u32 %v233, 4294901760
    %235 = vmatmul.f32.gmra.mxu0 %v234
    %v236 = vpop.f32.mrf.mxu0
    %v237 = vadd.f32 %v201, %v236
    %v238 = vand.u32 %v57, 4294901760
    %v239 = vsub.f32 %v57, %v238
    %v240 = vand.u32 %v239, 4294901760
    %241 = vmatmul.f32.gmra.mxu0 %v240
    %v242 = vpop.f32.mrf.mxu0
    %v243 = vadd.f32 %v206, %v242
    %244 = vdwg.mxu0
    %245 = vmatpush.msra.mxu0 0.0
    %246 = vmatpush.msra.mxu0 0.0
    %247 = vmatpush.msra.mxu0 0.0
    %248 = vmatpush.msra.mxu0 0.0
    %249 = vmatpush.msra.mxu0 0.0
    %250 = vmatpush.msra.mxu0 0.0
    %251 = vmatpush.msra.mxu0 0.0
    %252 = vmatpush.msra.mxu0 0.0
    %v253 = vand.u32 %v51, 4294901760
    %v254 = vsub.f32 %v51, %v253
    %v255 = vand.u32 %v254, 4294901760
    %256 = vmatpush.msra.mxu0 %v255
    %v257 = vand.u32 %v50, 4294901760
    %v258 = vsub.f32 %v50, %v257
    %v259 = vand.u32 %v258, 4294901760
    %260 = vmatpush.msra.mxu0 %v259
    %v261 = vand.u32 %v49, 4294901760
    %v262 = vsub.f32 %v49, %v261
    %v263 = vand.u32 %v262, 4294901760
    %264 = vmatpush.msra.mxu0 %v263
    %v265 = vand.u32 %v48, 4294901760
    %v266 = vsub.f32 %v48, %v265
    %v267 = vand.u32 %v266, 4294901760
    %268 = vmatpush.msra.mxu0 %v267
    %v269 = vand.u32 %v47, 4294901760
    %v270 = vsub.f32 %v47, %v269
    %v271 = vand.u32 %v270, 4294901760
    %272 = vmatpush.msra.mxu0 %v271
    %v273 = vand.u32 %v46, 4294901760
    %v274 = vsub.f32 %v46, %v273
    %v275 = vand.u32 %v274, 4294901760
    %276 = vmatpush.msra.mxu0 %v275
    %v277 = vand.u32 %v45, 4294901760
    %v278 = vsub.f32 %v45, %v277
    %v279 = vand.u32 %v278, 4294901760
    %280 = vmatpush.msra.mxu0 %v279
    %v281 = vand.u32 %v44, 4294901760
    %v282 = vsub.f32 %v44, %v281
    %v283 = vand.u32 %v282, 4294901760
    %284 = vmatpush.msra.mxu0 %v283
    %v285 = vand.u32 %v54, 4294901760
    %286 = vmatmul.f32.gmra.mxu0 %v285
    %v287 = vpop.f32.mrf.mxu0
    %v288 = vadd.f32 %v237, %v287
    %v289 = vand.u32 %v57, 4294901760
    %290 = vmatmul.f32.gmra.mxu0 %v289
    %v291 = vpop.f32.mrf.mxu0
    %v292 = vadd.f32 %v243, %v291
    %293 = vdwg.mxu0
    %294 = vmatpush.msra.mxu0 0.0
    %295 = vmatpush.msra.mxu0 0.0
    %296 = vmatpush.msra.mxu0 0.0
    %297 = vmatpush.msra.mxu0 0.0
    %298 = vmatpush.msra.mxu0 0.0
    %299 = vmatpush.msra.mxu0 0.0
    %300 = vmatpush.msra.mxu0 0.0
    %301 = vmatpush.msra.mxu0 0.0
    %v302 = vand.u32 %v51, 4294901760
    %303 = vmatpush.msra.mxu0 %v302
    %v304 = vand.u32 %v50, 4294901760
    %305 = vmatpush.msra.mxu0 %v304
    %v306 = vand.u32 %v49, 4294901760
    %307 = vmatpush.msra.mxu0 %v306
    %v308 = vand.u32 %v48, 4294901760
    %309 = vmatpush.msra.mxu0 %v308
    %v310 = vand.u32 %v47, 4294901760
    %311 = vmatpush.msra.mxu0 %v310
    %v312 = vand.u32 %v46, 4294901760
    %313 = vmatpush.msra.mxu0 %v312
    %v314 = vand.u32 %v45, 4294901760
    %315 = vmatpush.msra.mxu0 %v314
    %v316 = vand.u32 %v44, 4294901760
    %317 = vmatpush.msra.mxu0 %v316
    %v318 = vand.u32 %v54, 4294901760
    %319 = vmatmul.f32.gmra.mxu0 %v318
    %v320 = vpop.f32.mrf.mxu0
    %v321 = vadd.f32 %v288, %v320
    %v322 = vand.u32 %v57, 4294901760
    %323 = vmatmul.f32.gmra.mxu0 %v322
    %v324 = vpop.f32.mrf.mxu0
    %v325 = vadd.f32 %v292, %v324
    %326 = vdwg.mxu0
    %327 = vst [vmem:[#allocation5] sm:$0xff] %v321
    %328 = vst [vmem:[#allocation5 + $0x8] sm:$0xff] %v325
    // Predicated region
    $region14: #{tpu_custom_call.1} parent=1 // pred_check
      _
    $region15: #{tpu_custom_call.1} parent=1 // pred_check_branch
      %330 = sbr.rel (0) target = $region17
    $region16: #{tpu_custom_call.1} parent=1 // pred_region
      %332 = vsyncadd [#allocation4], 0
      %s333 = sshll.u32 [#allocation5], 4
      %s334 = int_to_ptr.vmem [resolvable:$true] %s333
      %s335 = sshll.u32 %s2, 4
      %s336 = int_to_ptr.hbm [resolvable:$true] %s335
      %341 = dma.vmem_to_hbm [thread:$0]  %s334, 256, %s336, [#allocation4], 128, 128, 8
    $region17: #{tpu_custom_call.1} parent=1 // pred_fallthru
      _
    // Predicated region
    $region18: #{tpu_custom_call.1} parent=1 // pred_check
      _
    $region19: #{tpu_custom_call.1} parent=1 // pred_check_branch
      %343 = sbr.rel (0) target = $region21
    $region20: #{tpu_custom_call.1} parent=1 // pred_region
      %345 = dma.done [#allocation4], 256
    $region21: #{tpu_custom_call.1} parent=1 // pred_fallthru
      _
    %346 = vsyncpa [#allocation3], 1
    %347 = vsyncpa [#allocation4], 1

</llo_original>
